<compile_context>
chip_gen: v7x
topology: tpu7x:2x2x1
jax: 0.10.0
libtpu: 0.0.40
codegen_flags: <defaults>
</compile_context>

<pallas_src>
import jax
import jax.numpy as jnp
from jax.experimental import pallas as pl
from jax.experimental.pallas import tpu as pltpu


def _round_up(a, b):
    return (a + b - 1) // b * b


def _pow_clamped(x, p, eps, tdtype):
    # clamp(min=eps) then x**p via exp(p*log(x)); x >= eps > 0 so log is safe.
    xc = jnp.maximum(x.astype(jnp.float32), eps)
    if jnp.dtype(tdtype) == jnp.dtype(jnp.float32):
        return jnp.exp(p * jnp.log(xc))
    # Optional reduced-precision EUP path (v6e/v7x bf16 EUP ~2x rate); the
    # sum is still accumulated in f32.  Validate numerics before enabling.
    xe = xc.astype(tdtype)
    return jnp.exp(p.astype(tdtype) * jnp.log(xe)).astype(jnp.float32)


def _gem_single_pass_kernel(eps, inv_hw, tdtype):
    """Whole H*W fits in one block: reduce + finalize in a single grid step."""

    def kernel(p_ref, x_ref, o_ref):
        p = p_ref[0]                      # learnable scalar exponent (SMEM)
        xp = _pow_clamped(x_ref[...], p, eps, tdtype)
        # avg_pool2d over the full (H, W) window == mean over the lane axis;
        # use sum * (1/HW) (hoisted constant) instead of a per-row divide.
        m = jnp.sum(xp, axis=-1, keepdims=True) * inv_hw
        y = jnp.exp(jnp.log(m) * (1.0 / p))            # (...)**(1/p)
        # Lane-dense store: one (1, tile_nc) row per grid step.
        o_ref[...] = y.reshape(1, -1).astype(o_ref.dtype)

    return kernel


def _gem_accum_kernel(eps, inv_hw, hw, tile_hw, n_hw, tdtype):
    """Huge H*W: accumulate partial sums over an 'arbitrary' HW grid axis."""
    need_mask = (hw % tile_hw) != 0

    def kernel(p_ref, x_ref, o_ref, acc_ref):
        k = pl.program_id(1)

        @pl.when(k == 0)
        def _init():
            acc_ref[...] = jnp.zeros_like(acc_ref)

        p = p_ref[0]
        xp = _pow_clamped(x_ref[...], p, eps, tdtype)
        if need_mask:
            # Ragged last HW chunk: zero out-of-range lanes so garbage reads
            # never contaminate the running sum of real rows.
            col = jax.lax.broadcasted_iota(jnp.int32, xp.shape, 1) + k * tile_hw
            xp = jnp.where(col < hw, xp, 0.0)
        acc_ref[...] += jnp.sum(xp, axis=-1, keepdims=True)

        @pl.when(k == n_hw - 1)
        def _finalize():
            m = acc_ref[...] * inv_hw
            y = jnp.exp(jnp.log(m) * (1.0 / p))
            o_ref[...] = y.reshape(1, -1).astype(o_ref.dtype)

    return kernel


def gem_pallas(x, p, eps=1e-6, *, transcendental_dtype=jnp.float32):
    """x: (N, C, H, W) float array, p: shape (1,) float32 parameter."""
    N, C, H, W = x.shape
    NC, HW = N * C, H * W
    x2d = x.reshape(NC, HW)

    itemsize = jnp.dtype(x.dtype).itemsize
    # Sublane packing multiple: 8 rows for 32-bit, 16 for bf16, 32 for 8-bit.
    row_mult = max(8, 32 // itemsize)

    # Per-input-buffer budget; BlockSpec double-buffers, so VMEM use is ~2x
    # this, which fits the default scoped VMEM on every generation.
    target_bytes = 6 * 1024 * 1024
    # VMEM pads the lane (last) axis to 128, so budget against padded rows.
    row_vmem_bytes = _round_up(HW, 128) * itemsize

    if row_mult * row_vmem_bytes <= target_bytes:
        # Whole spatial extent in one chunk; spend the budget on rows.
        tile_hw, n_hw = HW, 1
        tile_nc = max(row_mult,
                      (target_bytes // row_vmem_bytes) // row_mult * row_mult)
    else:
        # Very large H*W: minimum row count, chunk HW (128-aligned) on a
        # second grid axis; partial sums live in a small VMEM scratch.
        tile_nc = row_mult
        tile_hw = max(128,
                      (target_bytes // (row_mult * itemsize)) // 128 * 128)
        tile_hw = min(tile_hw, _round_up(HW, 128))
        n_hw = pl.cdiv(HW, tile_hw)

    # Never tile wider than the (sublane-padded) problem, and keep >= 2 row
    # tiles when possible (v7x has 2 TensorCores; also enables DMA/compute
    # overlap even on single-core chips).
    tile_nc = min(tile_nc, _round_up(NC, row_mult))
    if pl.cdiv(NC, tile_nc) < 2 and NC > row_mult:
        tile_nc = _round_up(pl.cdiv(NC, 2), row_mult)
    grid_rows = pl.cdiv(NC, tile_nc)

    # NOTE: no jnp.pad.  If NC % tile_nc != 0 the last row-block reads OOB
    # rows (stale VMEM); their results (possibly NaN) occupy output rows that
    # are sliced off below.  Correct because every output row is independent.
    p_spec = pl.BlockSpec(memory_space=pltpu.MemorySpace.SMEM)

    if n_hw == 1:
        kernel = _gem_single_pass_kernel(eps, 1.0 / HW, transcendental_dtype)
        grid = (grid_rows,)
        in_specs = [p_spec, pl.BlockSpec((tile_nc, HW), lambda i: (i, 0))]
        out_specs = pl.BlockSpec((1, tile_nc), lambda i: (i, 0))
        scratch_shapes = ()
        dim_sems = ("parallel",)
    else:
        kernel = _gem_accum_kernel(eps, 1.0 / HW, HW, tile_hw, n_hw,
                                   transcendental_dtype)
        grid = (grid_rows, n_hw)
        in_specs = [p_spec,
                    pl.BlockSpec((tile_nc, tile_hw), lambda i, k: (i, k))]
        out_specs = pl.BlockSpec((1, tile_nc), lambda i, k: (i, 0))
        scratch_shapes = (pltpu.VMEM((tile_nc, 1), jnp.float32),)
        dim_sems = ("parallel", "arbitrary")

    out2d = pl.pallas_call(
        kernel,
        out_shape=jax.ShapeDtypeStruct((grid_rows, tile_nc), x.dtype),
        grid=grid,
        in_specs=in_specs,
        out_specs=out_specs,
        scratch_shapes=scratch_shapes,
        compiler_params=pltpu.CompilerParams(
            dimension_semantics=dim_sems,
            vmem_limit_bytes=32 * 1024 * 1024,   # explicit headroom, all gens
        ),
    )(p, x2d)

    # Flatten tiles back to rows, drop the (possibly garbage) padded rows.
    return out2d.reshape(-1)[:NC].reshape(N, C, 1, 1)


class GeM:
    """JAX/Pallas port of the PyTorch GeM module."""

    def __init__(self, p=3.0, eps=1e-6):
        # Parameter(torch.ones(1) * p) -> deterministic init.
        self.p = jnp.ones((1,), dtype=jnp.float32) * p
        self.eps = eps

    def __call__(self, x):
        return gem_pallas(x, self.p, self.eps)


def _gem_reference(x, p, eps):
    """Pure-JAX reference matching F.avg_pool2d(x.clamp(eps)**p, (H,W))**(1/p)."""
    xp = jnp.power(jnp.maximum(x, eps), p[0])
    m = jnp.mean(xp, axis=(-2, -1), keepdims=True)
    return jnp.power(m, 1.0 / p[0])


if __name__ == "__main__":
    key = jax.random.PRNGKey(0)
    N, C, H, W = 2, 4, 16, 16
    x = jax.random.uniform(key, (N, C, H, W), dtype=jnp.float32)

    model = GeM(p=3.0, eps=1e-6)
    y = jax.block_until_ready(model(x))

    y_ref = _gem_reference(x, model.p, model.eps)
    assert y.shape == (N, C, 1, 1), y.shape
    assert jnp.allclose(y, y_ref, atol=1e-5, rtol=1e-5), (
        float(jnp.max(jnp.abs(y - y_ref)))
    )
    print("KERNEL_OK")
</pallas_src>

<mosaic_0001>
module attributes {stable_mosaic.version = 11 : i64} {
  func.func @kernel(%arg0: i32, %arg1: memref<1xf32, #tpu.memory_space<smem>>, %arg2: memref<8x256xf32, #tpu.memory_space<vmem>>, %arg3: memref<1x8xf32, #tpu.memory_space<vmem>>) attributes {dimension_semantics = [#tpu.dimension_semantics<parallel>], iteration_bounds = array<i64: 1>, scalar_prefetch = 0 : i64, scratch_operands = 0 : i64, tpu.core_type = #tpu.core_type<tc>, window_params = [{transform_indices = @transform_0, window_bounds = array<i64: 1>}, {transform_indices = @transform_1, window_bounds = array<i64: 8, 256>}, {transform_indices = @transform_2, window_bounds = array<i64: 1, 8>}]} {
    %c0 = arith.constant 0 : index
    %0 = memref.load %arg1[%c0] : memref<1xf32, #tpu.memory_space<smem>>
    %c0_0 = arith.constant 0 : index
    %c0_1 = arith.constant 0 : index
    %1 = vector.load %arg2[%c0_0, %c0_1] : memref<8x256xf32, #tpu.memory_space<vmem>>, vector<8x256xf32>
    %cst = arith.constant 9.99999997E-7 : f32
    %2 = vector.broadcast %cst : f32 to vector<8x256xf32>
    %3 = arith.maximumf %1, %2 : vector<8x256xf32>
    %4 = math.log %3 : vector<8x256xf32>
    %5 = vector.broadcast %0 : f32 to vector<8x256xf32>
    %6 = arith.mulf %5, %4 : vector<8x256xf32>
    %7 = math.exp %6 : vector<8x256xf32>
    %cst_2 = arith.constant dense<0.000000e+00> : vector<8xf32>
    %8 = vector.multi_reduction <add>, %7, %cst_2 [1] : vector<8x256xf32> to vector<8xf32>
    %9 = vector.shape_cast %8 : vector<8xf32> to vector<8x1xf32>
    %cst_3 = arith.constant 3.906250e-03 : f32
    %10 = vector.broadcast %cst_3 : f32 to vector<8x1xf32>
    %11 = arith.mulf %9, %10 : vector<8x1xf32>
    %12 = math.log %11 : vector<8x1xf32>
    %cst_4 = arith.constant 1.000000e+00 : f32
    %13 = arith.divf %cst_4, %0 : f32
    %14 = vector.broadcast %13 : f32 to vector<8x1xf32>
    %15 = arith.mulf %12, %14 : vector<8x1xf32>
    %16 = math.exp %15 : vector<8x1xf32>
    %17 = vector.shape_cast %16 : vector<8x1xf32> to vector<1x8xf32>
    %c0_5 = arith.constant 0 : index
    %c0_6 = arith.constant 0 : index
    %18 = vector.load %arg3[%c0_5, %c0_6] : memref<1x8xf32, #tpu.memory_space<vmem>>, vector<1x8xf32>
    tpu.vector_store %arg3[%c0_5, %c0_6], %17 {strides = array<i32>} : memref<1x8xf32, #tpu.memory_space<vmem>>, vector<1x8xf32>,
    return
  }
  func.func @transform_0(%arg0: i32) -> i32 {
    %c0_i32 = arith.constant 0 : i32
    %c0_i32_0 = arith.constant 0 : i32
    return %c0_i32 : i32
  }
  func.func @transform_1(%arg0: i32) -> (i32, i32) {
    %c0_i32 = arith.constant 0 : i32
    %c0_i32_0 = arith.constant 0 : i32
    return %arg0, %c0_i32 : i32, i32
  }
  func.func @transform_2(%arg0: i32) -> (i32, i32) {
    %c0_i32 = arith.constant 0 : i32
    %c0_i32_0 = arith.constant 0 : i32
    return %arg0, %c0_i32 : i32, i32
  }
}

</mosaic_0001>

<llo_original>
// kernel: tpu_custom_call.1
$region0: #{tpu_custom_call.1}
  #allocation0 [shape = 'u32[]', space=smem, size = 0x4, offset = 0x4, fixed_abs, tag = 'smem constant byte address 0x4 - core index']
  #allocation1 [shape = 'u32[144,128]{1,0:T(1,128)}', space=vmem, size = 0x12000, scoped, tag = 'internal scratch']
  #allocation2 [shape = 'f32[1]{0:T(128)S(6)}', space=smem, size = 0x200, scoped, tag = 'scoped memory for tpu_custom_call.1']
  %s0 = inlined_call_operand.<no memory space> [shape: f32[1], index: 0, kind: input, shape index: {}]
  %s1 = inlined_call_operand.hbm [shape: f32[8,256], index: 1, kind: input, shape index: {}]
  %s2 = inlined_call_operand.hbm [shape: f32[1,8], index: 2, kind: output, shape index: {}]
  %s3 = sld [smem:[#allocation0]]
  $region22: #{tpu_custom_call.1} parent=0
    _
  %s5 = ssub.s32 1, %s3
  %s6 = scalar_select 0, %s5, %s3
  %7 = sst [smem:[#allocation2]] %s0
  $region1: #{tpu_custom_call.1} parent=0
    #allocation3 [shape = 'u8[8192]{0}', space=vmem, size = 0x2000, scoped, tag = 'input window, operand 1, single buffered']
    #allocation4 [shape = 's32[1]{0}', space=sflag, size = 0x4, scoped, tag = 'scoped memory for tpu_custom_call.1']
    #allocation5 [shape = 's32[1]{0}', space=sflag, size = 0x4, scoped, tag = 'scoped memory for tpu_custom_call.1']
    #allocation6 [shape = 'u8[512]{0}', space=vmem, size = 0x400, scoped, tag = 'output window, operand 0, single buffered']
    %8 = vsyncpa [#allocation4], 0
    %9 = vsyncpa [#allocation5], 0
    // Predicated region
    $region2: #{tpu_custom_call.1} parent=1 // pred_check
      _
    $region3: #{tpu_custom_call.1} parent=1 // pred_check_branch
      %11 = sbr.rel (0) target = $region5
    $region4: #{tpu_custom_call.1} parent=1 // pred_region
      _
    $region5: #{tpu_custom_call.1} parent=1 // pred_fallthru
      _
    // Predicated region
    $region6: #{tpu_custom_call.1} parent=1 // pred_check
      _
    $region7: #{tpu_custom_call.1} parent=1 // pred_check_branch
      %13 = sbr.rel (0) target = $region9
    $region8: #{tpu_custom_call.1} parent=1 // pred_region
      %s15 = ssub.s32 256, 256
      %16 = vsyncadd [#allocation4], %s15
      %s18 = sshll.u32 [#allocation3], 4
      %s19 = int_to_ptr.vmem [resolvable:$true] %s18
      %21 = dma.hbm_to_vmem [thread:$0]  %s1, 256, %s19, [#allocation4]
    $region9: #{tpu_custom_call.1} parent=1 // pred_fallthru
      _
    // Predicated region
    $region10: #{tpu_custom_call.1} parent=1 // pred_check
      _
    $region11: #{tpu_custom_call.1} parent=1 // pred_check_branch
      %23 = sbr.rel (0) target = $region13
    $region12: #{tpu_custom_call.1} parent=1 // pred_region
      %24 = dma.done [#allocation4], 256
    $region13: #{tpu_custom_call.1} parent=1 // pred_fallthru
      _
    %s25 = sld [smem:[#allocation2]]
    %v26 = vld [vmem:[#allocation3] sm:$0xff]
    %v27 = vld [vmem:[#allocation3 + $0x8] sm:$0xff]
    %v28 = vmax.f32 %v26, 1e-06
    %v29 = vmax.f32 %v27, 1e-06
    %v30 = vlog2.pop %v28
    %v31 = vmul.f32 %v30, 0.6931472
    %v32 = vlog2.pop %v29
    %v33 = vmul.f32 %v32, 0.6931472
    %v34 = vstv %s25
    %v35 = vmul.f32 %v34, %v31
    %v36 = vmul.f32 %v34, %v33
    %v37 = vmul.f32 %v35, 1.442695
    %v38 = vpow.pop %v37
    %v39 = vmul.f32 %v36, 1.442695
    %v40 = vpow.pop %v39
    %v41 = vadd.f32 %v38, %v40
    %42 = vadd.xlane.f32.xlu0 %v41
    %v43 = vpop.xlane.xlu0 %42
    %v44 = vmul.f32 %v43, 0.00390625
    %v45 = vlog2.pop %v44
    %v46 = vmul.f32 %v45, 0.6931472
    %v47 = vstv %s25
    %v48 = vrcp.pop %v47
    %s49 = vtos %v48
    %v50 = vstv %s49
    %v51 = vmul.f32 %v46, %v50
    %v52 = vmul.f32 %v51, 1.442695
    %v53 = vpow.pop %v52
    %v55 = vlaneseq
    %v56 = vand.u32 %v55, 127
    %v57 = vlaneseq
    %v58 = vshrl.u32 %v57, 7
    %v59 = vsub.s32 %v56, %v58
    %v60 = vrot.slane %v53, %v59
    %vm62 = vcmask 57344
    %63 = vst.msk [vmem:[#allocation6] sm:$0x1] %vm62, %v60
    // Predicated region
    $region14: #{tpu_custom_call.1} parent=1 // pred_check
      _
    $region15: #{tpu_custom_call.1} parent=1 // pred_check_branch
      %65 = sbr.rel (0) target = $region17
    $region16: #{tpu_custom_call.1} parent=1 // pred_region
      %s67 = ssub.s32 16, 16
      %68 = vsyncadd [#allocation5], %s67
      %s70 = sshll.u32 [#allocation6], 4
      %s71 = int_to_ptr.vmem [resolvable:$true] %s70
      %73 = dma.vmem_to_hbm [thread:$0]  %s71, 16, %s2, [#allocation5]
    $region17: #{tpu_custom_call.1} parent=1 // pred_fallthru
      _
    // Predicated region
    $region18: #{tpu_custom_call.1} parent=1 // pred_check
      _
    $region19: #{tpu_custom_call.1} parent=1 // pred_check_branch
      %75 = sbr.rel (0) target = $region21
    $region20: #{tpu_custom_call.1} parent=1 // pred_region
      %76 = dma.done [#allocation5], 16
    $region21: #{tpu_custom_call.1} parent=1 // pred_fallthru
      _
    %77 = vsyncpa [#allocation4], 1
    %78 = vsyncpa [#allocation5], 1

</llo_original>
